<compile_context>
chip_gen: v7x
topology: tpu7x:2x2x1
jax: 0.10.0
libtpu: 0.0.40
codegen_flags: <defaults>
</compile_context>

<pallas_src>
import functools

import jax
import jax.numpy as jnp
import numpy as np
from jax.experimental import pallas as pl
from jax.experimental.pallas import tpu as pltpu

D = 128  # packed lane width (state lanes [0:S), action lanes [S:S+A))


def _round_up(x, m):
    return ((x + m - 1) // m) * m


def _rollout_kernel(x0_ref, G_ref, g_ref, y_ref, x_scr, Gx_scr, *, t_blk, sp):
    """Sequential rollout: y_t = x_row_t @ G_t + g_t, t_blk steps per grid iter.

    G_ref streams the compact (sp<=8 sublane) step matrices; they are copied
    into the top rows of the persistent zero (128,128) scratch Gx_scr, whose
    rows [sp:128) stay zero forever, preserving the "only state lanes feed the
    next step" invariant while the MXU sees a native (1,128)@(128,128) matmul.
    """
    @pl.when(pl.program_id(0) == 0)
    def _():
        x_scr[...] = x0_ref[...]
        Gx_scr[...] = jnp.zeros_like(Gx_scr)     # rows [sp:) remain zero always

    x = x_scr[...]                               # (1, D) packed [x_t, u_{t-1}]
    for j in range(t_blk // 8):                  # groups of 8 steps
        rows = []
        for i in range(8):
            t = j * 8 + i
            Gx_scr[0:sp, :] = G_ref[t]           # refresh only the compact rows
            x = (jnp.dot(x, Gx_scr[...], preferred_element_type=jnp.float32)
                 + g_ref[pl.ds(t, 1), :])        # (1, D): [x_{t+1}, u_t]
            rows.append(x)
        # One unmasked (8,128) full-tile store per 8 steps instead of 8 masked
        # single-sublane stores.
        y_ref[pl.ds(j * 8, 8), :] = jnp.concatenate(rows, axis=0)
    x_scr[...] = x


def _cost_kernel(z_ref, Ch_ref, c_ref, cost_ref):
    """cost_r = z_r^T (0.5 C) z_r + z_r . c for a block of packed rows z_r.

    Emits a lane-dense (1, blk) cost row via a single NT matmul (ones @ p^T),
    so there are no cross-lane (XLU) reductions and the writeback is 4 B/row.
    """
    z = z_ref[...]                                           # (blk, D)
    w = (jnp.dot(z, Ch_ref[...], preferred_element_type=jnp.float32)
         + c_ref[...])                                       # (blk, D)
    p = z * w                                                # (blk, D)
    ones_row = jnp.ones((1, z.shape[1]), jnp.float32)
    cost_ref[...] = jax.lax.dot_general(                     # (1, blk)
        ones_row, p,
        dimension_numbers=(((1,), (1,)), ((), ())),
        preferred_element_type=jnp.float32)


def lqr_forward_pallas(F, f, C, c, K_all, k_all, x0, *, t_blk=64, cost_blk=512):
    """Pallas implementation of LQR.forward(policy, x0).

    Args:
      F: (S, N), f: (S,), C: (N, N), c: (N,), with N = S + A
      K_all: (T, A, S), k_all: (T, A), x0: (S,)
    Returns: (states (T+1, S), actions (T, A), costs (T+1,)) in float32.
    """
    F = F.astype(jnp.float32)
    f = f.astype(jnp.float32)
    C = C.astype(jnp.float32)
    c = c.astype(jnp.float32)
    K_all = K_all.astype(jnp.float32)
    k_all = k_all.astype(jnp.float32)
    x0 = x0.astype(jnp.float32)

    S = F.shape[0]
    N = F.shape[1]
    A = N - S
    T = K_all.shape[0]
    assert N <= D, "packed [state, action] layout requires state+action <= 128"
    SP = _round_up(max(S, 1), 8)          # padded state sublanes of compact G

    # ---- glue (cheap, batched): fold the policy into closed-loop matrices ----
    Fx, Fu = F[:, :S], F[:, S:]
    M = Fx[None, :, :] + jnp.einsum("sa,tab->tsb", Fu, K_all)     # (T, S, S)
    m = jnp.einsum("sa,ta->ts", Fu, k_all) + f[None, :]           # (T, S)

    t_blk = _round_up(min(_round_up(t_blk, 8), _round_up(T, 8)), 8)
    n_blk = -(-T // t_blk)
    T_pad = n_blk * t_blk

    # Compact per-step step matrix: only the SP state sublanes (padded steps = 0).
    G = jnp.zeros((T_pad, SP, D), jnp.float32)
    G = G.at[:T, :S, :S].set(jnp.transpose(M, (0, 2, 1)))         # M^T
    G = G.at[:T, :S, S:N].set(jnp.transpose(K_all, (0, 2, 1)))    # K^T
    g = jnp.zeros((T_pad, D), jnp.float32)
    g = g.at[:T, :S].set(m).at[:T, S:N].set(k_all)

    x0_pad = jnp.zeros((1, D), jnp.float32).at[0, :S].set(x0)

    # ---- pass 1: sequential rollout (serial chain, compact HBM stream) -------
    Y = pl.pallas_call(
        functools.partial(_rollout_kernel, t_blk=t_blk, sp=SP),
        out_shape=jax.ShapeDtypeStruct((T_pad, D), jnp.float32),
        grid_spec=pltpu.PrefetchScalarGridSpec(
            num_scalar_prefetch=0,
            grid=(n_blk,),
            in_specs=[
                pl.BlockSpec((1, D), lambda b: (0, 0)),              # x0
                pl.BlockSpec((t_blk, SP, D), lambda b: (b, 0, 0)),   # compact G
                pl.BlockSpec((t_blk, D), lambda b: (b, 0)),          # g block
            ],
            out_specs=pl.BlockSpec((t_blk, D), lambda b: (b, 0)),    # y rows
            scratch_shapes=[
                pltpu.VMEM((1, D), jnp.float32),    # carried packed row
                pltpu.VMEM((D, D), jnp.float32),    # expanded step matrix
            ],
        ),
        compiler_params=pltpu.CompilerParams(
            dimension_semantics=("arbitrary",)),
    )(x0_pad, G, g)

    # ---- glue: packed [x_t, u_t] rows, plus a final [x_T, 0] row --------------
    lane = jnp.arange(D)
    Xrows = jnp.concatenate([x0_pad, Y[:T]], axis=0)               # x_t in [0:S)
    Urows = jnp.concatenate([Y[:T], jnp.zeros((1, D), jnp.float32)], axis=0)
    Z = jnp.where((lane < S)[None, :], Xrows, Urows)               # (T+1, D)

    cost_blk = min(_round_up(cost_blk, 128), _round_up(T + 1, 128))
    n_cblk = -(-(T + 1) // cost_blk)
    ZR = n_cblk * cost_blk
    Z_pad = jnp.zeros((ZR, D), jnp.float32).at[:T + 1].set(Z)
    # 0.5*C folded once into the small constant operand (not a data prescale).
    Ch_pad = jnp.zeros((D, D), jnp.float32).at[:N, :N].set(0.5 * C)
    c_pad = jnp.zeros((1, D), jnp.float32).at[0, :N].set(c)

    # ---- pass 2: batched, parallel cost evaluation (incl. final cost) --------
    costs_row = pl.pallas_call(
        _cost_kernel,
        out_shape=jax.ShapeDtypeStruct((1, ZR), jnp.float32),
        grid_spec=pltpu.PrefetchScalarGridSpec(
            num_scalar_prefetch=0,
            grid=(n_cblk,),
            in_specs=[
                pl.BlockSpec((cost_blk, D), lambda b: (b, 0)),       # Z block
                pl.BlockSpec((D, D), lambda b: (0, 0)),              # 0.5*C
                pl.BlockSpec((1, D), lambda b: (0, 0)),              # c
            ],
            out_specs=pl.BlockSpec((1, cost_blk), lambda b: (0, b)), # cost row
        ),
        compiler_params=pltpu.CompilerParams(
            dimension_semantics=("parallel",)),
    )(Z_pad, Ch_pad, c_pad)

    # ---- strip padding and assemble outputs like the PyTorch module ----------
    states = jnp.concatenate([x0[None, :], Y[:T, :S]], axis=0)     # (T+1, S)
    actions = Y[:T, S:S + A]                                       # (T, A)
    costs = costs_row[0, :T + 1]                                   # (T+1,)
    return states, actions, costs


# Pure-JAX reference (mirrors the PyTorch forward) for a sanity check.
def lqr_forward_ref(F, f, C, c, K_all, k_all, x0):
    S = F.shape[0]
    x = x0
    states, actions, costs = [x0], [], []
    for t in range(K_all.shape[0]):
        u = K_all[t] @ x + k_all[t]
        inp = jnp.concatenate([x, u])
        nx = F @ inp + f
        cost = 0.5 * inp @ C @ inp + inp @ c
        states.append(nx)
        actions.append(u)
        costs.append(cost)
        x = nx
    costs.append(0.5 * x @ C[:S, :S] @ x + x @ c[:S])
    return jnp.stack(states), jnp.stack(actions), jnp.stack(costs)


if __name__ == "__main__":
    # Small deterministic LQR instance: state_size=3, action_size=2, T=8.
    state_size, action_size, T = 3, 2, 8
    n_dim = state_size + action_size

    key = jax.random.PRNGKey(0)
    kF, kf, kC, kc, kK, kk, kx = jax.random.split(key, 7)

    F = 0.3 * jax.random.normal(kF, (state_size, n_dim), jnp.float32)
    f = 0.1 * jax.random.normal(kf, (state_size,), jnp.float32)
    C = 0.3 * jax.random.normal(kC, (n_dim, n_dim), jnp.float32)
    c = 0.1 * jax.random.normal(kc, (n_dim,), jnp.float32)
    K_all = 0.3 * jax.random.normal(kK, (T, action_size, state_size), jnp.float32)
    k_all = 0.1 * jax.random.normal(kk, (T, action_size), jnp.float32)
    x0 = jax.random.normal(kx, (state_size,), jnp.float32)

    states, actions, costs = lqr_forward_pallas(F, f, C, c, K_all, k_all, x0)
    jax.block_until_ready((states, actions, costs))

    states_r, actions_r, costs_r = lqr_forward_ref(F, f, C, c, K_all, k_all, x0)
    np.testing.assert_allclose(np.asarray(states), np.asarray(states_r),
                               rtol=1e-4, atol=1e-5)
    np.testing.assert_allclose(np.asarray(actions), np.asarray(actions_r),
                               rtol=1e-4, atol=1e-5)
    np.testing.assert_allclose(np.asarray(costs), np.asarray(costs_r),
                               rtol=1e-4, atol=1e-5)

    # TODO(synk): LQR.backward()/compute_K need a matrix inverse (Riccati
    # recursion); that is not part of forward() and is not implemented here.
    print("KERNEL_OK")
</pallas_src>

<mosaic_0001>
module attributes {stable_mosaic.version = 11 : i64} {
  func.func @_rollout_kernel(%arg0: i32, %arg1: memref<1x128xf32, #tpu.memory_space<vmem>>, %arg2: memref<8x8x128xf32, #tpu.memory_space<vmem>>, %arg3: memref<8x128xf32, #tpu.memory_space<vmem>>, %arg4: memref<8x128xf32, #tpu.memory_space<vmem>>, %arg5: memref<1x128xf32, #tpu.memory_space<vmem>>, %arg6: memref<128x128xf32, #tpu.memory_space<vmem>>) attributes {dimension_semantics = [#tpu.dimension_semantics<arbitrary>], iteration_bounds = array<i64: 1>, scalar_prefetch = 0 : i64, scratch_operands = 2 : i64, tpu.core_type = #tpu.core_type<tc>, window_params = [{pipeline_mode = #tpu.pipeline_mode<synchronous>, transform_indices = @transform_0, window_bounds = array<i64: 1, 128>}, {transform_indices = @transform_1, window_bounds = array<i64: 8, 8, 128>}, {transform_indices = @transform_2, window_bounds = array<i64: 8, 128>}, {transform_indices = @transform_3, window_bounds = array<i64: 8, 128>}]} {
    %c0_i32 = arith.constant 0 : i32
    %0 = arith.cmpi eq, %arg0, %c0_i32 : i32
    %1 = arith.extui %0 : i1 to i32
    %c0_i32_0 = arith.constant 0 : i32
    %2 = arith.cmpi ne, %1, %c0_i32_0 : i32
    scf.if %2 {
      %c0_78 = arith.constant 0 : index
      %c0_79 = arith.constant 0 : index
      %63 = vector.load %arg1[%c0_78, %c0_79] : memref<1x128xf32, #tpu.memory_space<vmem>>, vector<1x128xf32>
      %c0_80 = arith.constant 0 : index
      %c0_81 = arith.constant 0 : index
      %64 = vector.load %arg5[%c0_80, %c0_81] : memref<1x128xf32, #tpu.memory_space<vmem>>, vector<1x128xf32>
      tpu.vector_store %arg5[%c0_80, %c0_81], %63 {strides = array<i32>} : memref<1x128xf32, #tpu.memory_space<vmem>>, vector<1x128xf32>,
      %cst_82 = arith.constant 0.000000e+00 : f32
      %65 = vector.broadcast %cst_82 : f32 to vector<128x128xf32>
      %c0_83 = arith.constant 0 : index
      %c0_84 = arith.constant 0 : index
      %66 = vector.load %arg6[%c0_83, %c0_84] : memref<128x128xf32, #tpu.memory_space<vmem>>, vector<128x128xf32>
      tpu.vector_store %arg6[%c0_83, %c0_84], %65 {strides = array<i32>} : memref<128x128xf32, #tpu.memory_space<vmem>>, vector<128x128xf32>,
    } else {
    }
    %c0 = arith.constant 0 : index
    %c0_1 = arith.constant 0 : index
    %3 = vector.load %arg5[%c0, %c0_1] : memref<1x128xf32, #tpu.memory_space<vmem>>, vector<1x128xf32>
    %c0_2 = arith.constant 0 : index
    %c0_3 = arith.constant 0 : index
    %c0_4 = arith.constant 0 : index
    %4 = vector.load %arg2[%c0_2, %c0_3, %c0_4] : memref<8x8x128xf32, #tpu.memory_space<vmem>>, vector<1x8x128xf32>
    %5 = vector.shape_cast %4 : vector<1x8x128xf32> to vector<8x128xf32>
    %c0_5 = arith.constant 0 : index
    %c0_6 = arith.constant 0 : index
    %6 = vector.load %arg6[%c0_5, %c0_6] : memref<128x128xf32, #tpu.memory_space<vmem>>, vector<8x128xf32>
    tpu.vector_store %arg6[%c0_5, %c0_6], %5 {strides = array<i32>} : memref<128x128xf32, #tpu.memory_space<vmem>>, vector<8x128xf32>,
    %c0_7 = arith.constant 0 : index
    %c0_8 = arith.constant 0 : index
    %7 = vector.load %arg6[%c0_7, %c0_8] : memref<128x128xf32, #tpu.memory_space<vmem>>, vector<128x128xf32>
    %cst = arith.constant dense<0.000000e+00> : vector<1x128xf32>
    %8 = tpu.matmul %3, %7, %cst {dimension_numbers = #tpu.dot_dimension_numbers<[1], [0], [0], [1], [0, 0, 1, 1], [], []>} : vector<1x128xf32>, vector<128x128xf32>, vector<1x128xf32> -> vector<1x128xf32>
    %c0_9 = arith.constant 0 : index
    %c0_10 = arith.constant 0 : index
    %9 = vector.load %arg3[%c0_9, %c0_10] : memref<8x128xf32, #tpu.memory_space<vmem>>, vector<1x128xf32>
    %10 = arith.addf %8, %9 : vector<1x128xf32>
    %c1 = arith.constant 1 : index
    %c0_11 = arith.constant 0 : index
    %c0_12 = arith.constant 0 : index
    %11 = vector.load %arg2[%c1, %c0_11, %c0_12] : memref<8x8x128xf32, #tpu.memory_space<vmem>>, vector<1x8x128xf32>
    %12 = vector.shape_cast %11 : vector<1x8x128xf32> to vector<8x128xf32>
    %c0_13 = arith.constant 0 : index
    %c0_14 = arith.constant 0 : index
    %13 = vector.load %arg6[%c0_13, %c0_14] : memref<128x128xf32, #tpu.memory_space<vmem>>, vector<8x128xf32>
    tpu.vector_store %arg6[%c0_13, %c0_14], %12 {strides = array<i32>} : memref<128x128xf32, #tpu.memory_space<vmem>>, vector<8x128xf32>,
    %c0_15 = arith.constant 0 : index
    %c0_16 = arith.constant 0 : index
    %14 = vector.load %arg6[%c0_15, %c0_16] : memref<128x128xf32, #tpu.memory_space<vmem>>, vector<128x128xf32>
    %cst_17 = arith.constant dense<0.000000e+00> : vector<1x128xf32>
    %15 = tpu.matmul %10, %14, %cst_17 {dimension_numbers = #tpu.dot_dimension_numbers<[1], [0], [0], [1], [0, 0, 1, 1], [], []>} : vector<1x128xf32>, vector<128x128xf32>, vector<1x128xf32> -> vector<1x128xf32>
    %c1_18 = arith.constant 1 : index
    %c0_19 = arith.constant 0 : index
    %16 = vector.load %arg3[%c1_18, %c0_19] : memref<8x128xf32, #tpu.memory_space<vmem>>, vector<1x128xf32>
    %17 = arith.addf %15, %16 : vector<1x128xf32>
    %c2 = arith.constant 2 : index
    %c0_20 = arith.constant 0 : index
    %c0_21 = arith.constant 0 : index
    %18 = vector.load %arg2[%c2, %c0_20, %c0_21] : memref<8x8x128xf32, #tpu.memory_space<vmem>>, vector<1x8x128xf32>
    %19 = vector.shape_cast %18 : vector<1x8x128xf32> to vector<8x128xf32>
    %c0_22 = arith.constant 0 : index
    %c0_23 = arith.constant 0 : index
    %20 = vector.load %arg6[%c0_22, %c0_23] : memref<128x128xf32, #tpu.memory_space<vmem>>, vector<8x128xf32>
    tpu.vector_store %arg6[%c0_22, %c0_23], %19 {strides = array<i32>} : memref<128x128xf32, #tpu.memory_space<vmem>>, vector<8x128xf32>,
    %c0_24 = arith.constant 0 : index
    %c0_25 = arith.constant 0 : index
    %21 = vector.load %arg6[%c0_24, %c0_25] : memref<128x128xf32, #tpu.memory_space<vmem>>, vector<128x128xf32>
    %cst_26 = arith.constant dense<0.000000e+00> : vector<1x128xf32>
    %22 = tpu.matmul %17, %21, %cst_26 {dimension_numbers = #tpu.dot_dimension_numbers<[1], [0], [0], [1], [0, 0, 1, 1], [], []>} : vector<1x128xf32>, vector<128x128xf32>, vector<1x128xf32> -> vector<1x128xf32>
    %c2_27 = arith.constant 2 : index
    %c0_28 = arith.constant 0 : index
    %23 = vector.load %arg3[%c2_27, %c0_28] : memref<8x128xf32, #tpu.memory_space<vmem>>, vector<1x128xf32>
    %24 = arith.addf %22, %23 : vector<1x128xf32>
    %c3 = arith.constant 3 : index
    %c0_29 = arith.constant 0 : index
    %c0_30 = arith.constant 0 : index
    %25 = vector.load %arg2[%c3, %c0_29, %c0_30] : memref<8x8x128xf32, #tpu.memory_space<vmem>>, vector<1x8x128xf32>
    %26 = vector.shape_cast %25 : vector<1x8x128xf32> to vector<8x128xf32>
    %c0_31 = arith.constant 0 : index
    %c0_32 = arith.constant 0 : index
    %27 = vector.load %arg6[%c0_31, %c0_32] : memref<128x128xf32, #tpu.memory_space<vmem>>, vector<8x128xf32>
    tpu.vector_store %arg6[%c0_31, %c0_32], %26 {strides = array<i32>} : memref<128x128xf32, #tpu.memory_space<vmem>>, vector<8x128xf32>,
    %c0_33 = arith.constant 0 : index
    %c0_34 = arith.constant 0 : index
    %28 = vector.load %arg6[%c0_33, %c0_34] : memref<128x128xf32, #tpu.memory_space<vmem>>, vector<128x128xf32>
    %cst_35 = arith.constant dense<0.000000e+00> : vector<1x128xf32>
    %29 = tpu.matmul %24, %28, %cst_35 {dimension_numbers = #tpu.dot_dimension_numbers<[1], [0], [0], [1], [0, 0, 1, 1], [], []>} : vector<1x128xf32>, vector<128x128xf32>, vector<1x128xf32> -> vector<1x128xf32>
    %c3_36 = arith.constant 3 : index
    %c0_37 = arith.constant 0 : index
    %30 = vector.load %arg3[%c3_36, %c0_37] : memref<8x128xf32, #tpu.memory_space<vmem>>, vector<1x128xf32>
    %31 = arith.addf %29, %30 : vector<1x128xf32>
    %c4 = arith.constant 4 : index
    %c0_38 = arith.constant 0 : index
    %c0_39 = arith.constant 0 : index
    %32 = vector.load %arg2[%c4, %c0_38, %c0_39] : memref<8x8x128xf32, #tpu.memory_space<vmem>>, vector<1x8x128xf32>
    %33 = vector.shape_cast %32 : vector<1x8x128xf32> to vector<8x128xf32>
    %c0_40 = arith.constant 0 : index
    %c0_41 = arith.constant 0 : index
    %34 = vector.load %arg6[%c0_40, %c0_41] : memref<128x128xf32, #tpu.memory_space<vmem>>, vector<8x128xf32>
    tpu.vector_store %arg6[%c0_40, %c0_41], %33 {strides = array<i32>} : memref<128x128xf32, #tpu.memory_space<vmem>>, vector<8x128xf32>,
    %c0_42 = arith.constant 0 : index
    %c0_43 = arith.constant 0 : index
    %35 = vector.load %arg6[%c0_42, %c0_43] : memref<128x128xf32, #tpu.memory_space<vmem>>, vector<128x128xf32>
    %cst_44 = arith.constant dense<0.000000e+00> : vector<1x128xf32>
    %36 = tpu.matmul %31, %35, %cst_44 {dimension_numbers = #tpu.dot_dimension_numbers<[1], [0], [0], [1], [0, 0, 1, 1], [], []>} : vector<1x128xf32>, vector<128x128xf32>, vector<1x128xf32> -> vector<1x128xf32>
    %c4_45 = arith.constant 4 : index
    %c0_46 = arith.constant 0 : index
    %37 = vector.load %arg3[%c4_45, %c0_46] : memref<8x128xf32, #tpu.memory_space<vmem>>, vector<1x128xf32>
    %38 = arith.addf %36, %37 : vector<1x128xf32>
    %c5 = arith.constant 5 : index
    %c0_47 = arith.constant 0 : index
    %c0_48 = arith.constant 0 : index
    %39 = vector.load %arg2[%c5, %c0_47, %c0_48] : memref<8x8x128xf32, #tpu.memory_space<vmem>>, vector<1x8x128xf32>
    %40 = vector.shape_cast %39 : vector<1x8x128xf32> to vector<8x128xf32>
    %c0_49 = arith.constant 0 : index
    %c0_50 = arith.constant 0 : index
    %41 = vector.load %arg6[%c0_49, %c0_50] : memref<128x128xf32, #tpu.memory_space<vmem>>, vector<8x128xf32>
    tpu.vector_store %arg6[%c0_49, %c0_50], %40 {strides = array<i32>} : memref<128x128xf32, #tpu.memory_space<vmem>>, vector<8x128xf32>,
    %c0_51 = arith.constant 0 : index
    %c0_52 = arith.constant 0 : index
    %42 = vector.load %arg6[%c0_51, %c0_52] : memref<128x128xf32, #tpu.memory_space<vmem>>, vector<128x128xf32>
    %cst_53 = arith.constant dense<0.000000e+00> : vector<1x128xf32>
    %43 = tpu.matmul %38, %42, %cst_53 {dimension_numbers = #tpu.dot_dimension_numbers<[1], [0], [0], [1], [0, 0, 1, 1], [], []>} : vector<1x128xf32>, vector<128x128xf32>, vector<1x128xf32> -> vector<1x128xf32>
    %c5_54 = arith.constant 5 : index
    %c0_55 = arith.constant 0 : index
    %44 = vector.load %arg3[%c5_54, %c0_55] : memref<8x128xf32, #tpu.memory_space<vmem>>, vector<1x128xf32>
    %45 = arith.addf %43, %44 : vector<1x128xf32>
    %c6 = arith.constant 6 : index
    %c0_56 = arith.constant 0 : index
    %c0_57 = arith.constant 0 : index
    %46 = vector.load %arg2[%c6, %c0_56, %c0_57] : memref<8x8x128xf32, #tpu.memory_space<vmem>>, vector<1x8x128xf32>
    %47 = vector.shape_cast %46 : vector<1x8x128xf32> to vector<8x128xf32>
    %c0_58 = arith.constant 0 : index
    %c0_59 = arith.constant 0 : index
    %48 = vector.load %arg6[%c0_58, %c0_59] : memref<128x128xf32, #tpu.memory_space<vmem>>, vector<8x128xf32>
    tpu.vector_store %arg6[%c0_58, %c0_59], %47 {strides = array<i32>} : memref<128x128xf32, #tpu.memory_space<vmem>>, vector<8x128xf32>,
    %c0_60 = arith.constant 0 : index
    %c0_61 = arith.constant 0 : index
    %49 = vector.load %arg6[%c0_60, %c0_61] : memref<128x128xf32, #tpu.memory_space<vmem>>, vector<128x128xf32>
    %cst_62 = arith.constant dense<0.000000e+00> : vector<1x128xf32>
    %50 = tpu.matmul %45, %49, %cst_62 {dimension_numbers = #tpu.dot_dimension_numbers<[1], [0], [0], [1], [0, 0, 1, 1], [], []>} : vector<1x128xf32>, vector<128x128xf32>, vector<1x128xf32> -> vector<1x128xf32>
    %c6_63 = arith.constant 6 : index
    %c0_64 = arith.constant 0 : index
    %51 = vector.load %arg3[%c6_63, %c0_64] : memref<8x128xf32, #tpu.memory_space<vmem>>, vector<1x128xf32>
    %52 = arith.addf %50, %51 : vector<1x128xf32>
    %c7 = arith.constant 7 : index
    %c0_65 = arith.constant 0 : index
    %c0_66 = arith.constant 0 : index
    %53 = vector.load %arg2[%c7, %c0_65, %c0_66] : memref<8x8x128xf32, #tpu.memory_space<vmem>>, vector<1x8x128xf32>
    %54 = vector.shape_cast %53 : vector<1x8x128xf32> to vector<8x128xf32>
    %c0_67 = arith.constant 0 : index
    %c0_68 = arith.constant 0 : index
    %55 = vector.load %arg6[%c0_67, %c0_68] : memref<128x128xf32, #tpu.memory_space<vmem>>, vector<8x128xf32>
    tpu.vector_store %arg6[%c0_67, %c0_68], %54 {strides = array<i32>} : memref<128x128xf32, #tpu.memory_space<vmem>>, vector<8x128xf32>,
    %c0_69 = arith.constant 0 : index
    %c0_70 = arith.constant 0 : index
    %56 = vector.load %arg6[%c0_69, %c0_70] : memref<128x128xf32, #tpu.memory_space<vmem>>, vector<128x128xf32>
    %cst_71 = arith.constant dense<0.000000e+00> : vector<1x128xf32>
    %57 = tpu.matmul %52, %56, %cst_71 {dimension_numbers = #tpu.dot_dimension_numbers<[1], [0], [0], [1], [0, 0, 1, 1], [], []>} : vector<1x128xf32>, vector<128x128xf32>, vector<1x128xf32> -> vector<1x128xf32>
    %c7_72 = arith.constant 7 : index
    %c0_73 = arith.constant 0 : index
    %58 = vector.load %arg3[%c7_72, %c0_73] : memref<8x128xf32, #tpu.memory_space<vmem>>, vector<1x128xf32>
    %59 = arith.addf %57, %58 : vector<1x128xf32>
    %60 = tpu.concatenate %10, %17, %24, %31, %38, %45, %52, %59 in 0 : vector<1x128xf32>, vector<1x128xf32>, vector<1x128xf32>, vector<1x128xf32>, vector<1x128xf32>, vector<1x128xf32>, vector<1x128xf32>, vector<1x128xf32> -> vector<8x128xf32>
    %c0_74 = arith.constant 0 : index
    %c0_75 = arith.constant 0 : index
    %61 = vector.load %arg4[%c0_74, %c0_75] : memref<8x128xf32, #tpu.memory_space<vmem>>, vector<8x128xf32>
    tpu.vector_store %arg4[%c0_74, %c0_75], %60 {strides = array<i32>} : memref<8x128xf32, #tpu.memory_space<vmem>>, vector<8x128xf32>,
    %c0_76 = arith.constant 0 : index
    %c0_77 = arith.constant 0 : index
    %62 = vector.load %arg5[%c0_76, %c0_77] : memref<1x128xf32, #tpu.memory_space<vmem>>, vector<1x128xf32>
    tpu.vector_store %arg5[%c0_76, %c0_77], %59 {strides = array<i32>} : memref<1x128xf32, #tpu.memory_space<vmem>>, vector<1x128xf32>,
    return
  }
  func.func @transform_0(%arg0: i32) -> (i32, i32) {
    %c0_i32 = arith.constant 0 : i32
    %c0_i32_0 = arith.constant 0 : i32
    %c0_i32_1 = arith.constant 0 : i32
    return %c0_i32, %c0_i32_0 : i32, i32
  }
  func.func @transform_1(%arg0: i32) -> (i32, i32, i32) {
    %c0_i32 = arith.constant 0 : i32
    %c0_i32_0 = arith.constant 0 : i32
    %c0_i32_1 = arith.constant 0 : i32
    return %arg0, %c0_i32, %c0_i32_0 : i32, i32, i32
  }
  func.func @transform_2(%arg0: i32) -> (i32, i32) {
    %c0_i32 = arith.constant 0 : i32
    %c0_i32_0 = arith.constant 0 : i32
    return %arg0, %c0_i32 : i32, i32
  }
  func.func @transform_3(%arg0: i32) -> (i32, i32) {
    %c0_i32 = arith.constant 0 : i32
    %c0_i32_0 = arith.constant 0 : i32
    return %arg0, %c0_i32 : i32, i32
  }
}

</mosaic_0001>

<llo_original>
// kernel: tpu_custom_call.1
$region0: #{tpu_custom_call.1}
  #allocation0 [shape = 'u32[]', space=smem, size = 0x4, offset = 0x4, fixed_abs, tag = 'smem constant byte address 0x4 - core index']
  #allocation1 [shape = 'u32[144,128]{1,0:T(1,128)}', space=vmem, size = 0x12000, scoped, tag = 'internal scratch']
  #allocation2 [shape = 'f32[1,128]{1,0:T(1,128)}', space=vmem, size = 0x200, scoped, tag = 'scratch operand']
  #allocation3 [shape = 'f32[128,128]{1,0:T(8,128)}', space=vmem, size = 0x10000, scoped, tag = 'scratch operand']
  %s0 = inlined_call_operand.hbm [shape: f32[1,128], index: 0, kind: input, shape index: {}]
  %s1 = inlined_call_operand.hbm [shape: f32[8,8,128], index: 1, kind: input, shape index: {}]
  %s2 = inlined_call_operand.hbm [shape: f32[8,128], index: 2, kind: input, shape index: {}]
  %s3 = inlined_call_operand.hbm [shape: f32[8,128], index: 3, kind: output, shape index: {}]
  %s4 = sld [smem:[#allocation0]]
  $region38: #{tpu_custom_call.1} parent=0
    _
  %s6 = ssub.s32 1, %s4
  %s7 = scalar_select 0, %s6, %s4
  $region1: #{tpu_custom_call.1} parent=0
    #allocation4 [shape = 'u8[512]{0}', space=vmem, size = 0x400, scoped, tag = 'input window, operand 0, single buffered']
    #allocation5 [shape = 's32[1]{0}', space=sflag, size = 0x4, scoped, tag = 'scoped memory for tpu_custom_call.1']
    #allocation6 [shape = 's32[1]{0}', space=sflag, size = 0x4, scoped, tag = 'scoped memory for tpu_custom_call.1']
    #allocation7 [shape = 'u8[32768]{0}', space=vmem, size = 0x8000, scoped, tag = 'input window, operand 1, single buffered']
    #allocation8 [shape = 's32[1]{0}', space=sflag, size = 0x4, scoped, tag = 'scoped memory for tpu_custom_call.1']
    #allocation9 [shape = 'u8[4096]{0}', space=vmem, size = 0x1000, scoped, tag = 'input window, operand 2, single buffered']
    #allocation10 [shape = 'u8[4096]{0}', space=vmem, size = 0x1000, scoped, tag = 'output window, operand 0, single buffered']
    %8 = vsyncpa [#allocation5], 0
    %9 = vsyncpa [#allocation8], 0
    %10 = vsyncpa [#allocation6], 0
    // Predicated region
    $region2: #{tpu_custom_call.1} parent=1 // pred_check
      _
    $region3: #{tpu_custom_call.1} parent=1 // pred_check_branch
      %12 = sbr.rel (0) target = $region5
    $region4: #{tpu_custom_call.1} parent=1 // pred_region
      %s14 = ssub.s32 16, 16
      %15 = vsyncadd [#allocation5], %s14
      %s17 = sshll.u32 [#allocation4], 4
      %s18 = int_to_ptr.vmem [resolvable:$true] %s17
      %20 = dma.hbm_to_vmem [thread:$0]  %s0, 16, %s18, [#allocation5]
    $region5: #{tpu_custom_call.1} parent=1 // pred_fallthru
      _
    // Predicated region
    $region6: #{tpu_custom_call.1} parent=1 // pred_check
      _
    $region7: #{tpu_custom_call.1} parent=1 // pred_check_branch
      %22 = sbr.rel (0) target = $region9
    $region8: #{tpu_custom_call.1} parent=1 // pred_region
      %s24 = ssub.s32 1024, 1024
      %25 = vsyncadd [#allocation8], %s24
      %s26 = sshll.u32 [#allocation7], 4
      %s27 = int_to_ptr.vmem [resolvable:$true] %s26
      %32 = dma.hbm_to_vmem [thread:$0]  %s1, 1024, %s27, [#allocation8], 128, 128, 8
    $region9: #{tpu_custom_call.1} parent=1 // pred_fallthru
      _
    // Predicated region
    $region10: #{tpu_custom_call.1} parent=1 // pred_check
      _
    $region11: #{tpu_custom_call.1} parent=1 // pred_check_branch
      %34 = sbr.rel (0) target = $region13
    $region12: #{tpu_custom_call.1} parent=1 // pred_region
      %s36 = ssub.s32 128, 128
      %37 = vsyncadd [#allocation8], %s36
      %s39 = sshll.u32 [#allocation9], 4
      %s40 = int_to_ptr.vmem [resolvable:$true] %s39
      %42 = dma.hbm_to_vmem [thread:$0]  %s2, 128, %s40, [#allocation8]
    $region13: #{tpu_custom_call.1} parent=1 // pred_fallthru
      _
    // Predicated region
    $region14: #{tpu_custom_call.1} parent=1 // pred_check
      _
    $region15: #{tpu_custom_call.1} parent=1 // pred_check_branch
      %44 = sbr.rel (0) target = $region17
    $region16: #{tpu_custom_call.1} parent=1 // pred_region
      %45 = dma.done [#allocation5], 16
    $region17: #{tpu_custom_call.1} parent=1 // pred_fallthru
      _
    // Predicated region
    $region18: #{tpu_custom_call.1} parent=1 // pred_check
      _
    $region19: #{tpu_custom_call.1} parent=1 // pred_check_branch
      %47 = sbr.rel (0) target = $region21
    $region20: #{tpu_custom_call.1} parent=1 // pred_region
      %48 = dma.done [#allocation8], 1024
    $region21: #{tpu_custom_call.1} parent=1 // pred_fallthru
      _
    // Predicated region
    $region22: #{tpu_custom_call.1} parent=1 // pred_check
      _
    $region23: #{tpu_custom_call.1} parent=1 // pred_check_branch
      %50 = sbr.rel (0) target = $region25
    $region24: #{tpu_custom_call.1} parent=1 // pred_region
      %51 = dma.done [#allocation8], 128
    $region25: #{tpu_custom_call.1} parent=1 // pred_fallthru
      _
    %p52 = scmp.eq.s32.totalorder 0, 0
    // Predicated region
    $region26: #{tpu_custom_call.1} parent=1 // pred_check
      %p53 = pneg %p52
    $region27: #{tpu_custom_call.1} parent=1 // pred_check_branch
      %55 = sbr.rel (%p53) target = $region29
    $region28: #{tpu_custom_call.1} parent=1 // pred_region
      %v56 = vld [vmem:[#allocation4] sm:$0x1]
      %57 = vst [vmem:[#allocation2] sm:$0x1] %v56
      %58 = vst [vmem:[#allocation3] sm:$0xff] 0.0
      %59 = vst [vmem:[#allocation3 + $0x8] sm:$0xff] 0.0
      %60 = vst [vmem:[#allocation3 + $0x10] sm:$0xff] 0.0
      %61 = vst [vmem:[#allocation3 + $0x18] sm:$0xff] 0.0
      %62 = vst [vmem:[#allocation3 + $0x20] sm:$0xff] 0.0
      %63 = vst [vmem:[#allocation3 + $0x28] sm:$0xff] 0.0
      %64 = vst [vmem:[#allocation3 + $0x30] sm:$0xff] 0.0
      %65 = vst [vmem:[#allocation3 + $0x38] sm:$0xff] 0.0
      %66 = vst [vmem:[#allocation3 + $0x40] sm:$0xff] 0.0
      %67 = vst [vmem:[#allocation3 + $0x48] sm:$0xff] 0.0
      %68 = vst [vmem:[#allocation3 + $0x50] sm:$0xff] 0.0
      %69 = vst [vmem:[#allocation3 + $0x58] sm:$0xff] 0.0
      %70 = vst [vmem:[#allocation3 + $0x60] sm:$0xff] 0.0
      %71 = vst [vmem:[#allocation3 + $0x68] sm:$0xff] 0.0
      %72 = vst [vmem:[#allocation3 + $0x70] sm:$0xff] 0.0
      %73 = vst [vmem:[#allocation3 + $0x78] sm:$0xff] 0.0
    $region29: #{tpu_custom_call.1} parent=1 // pred_fallthru
      _
    %v74 = vld [vmem:[#allocation2] sm:$0x1]
    %v75 = vld [vmem:[#allocation7] sm:$0xff]
    %76 = vst [vmem:[#allocation3] sm:$0xff] %v75
    %v77 = vld [vmem:[#allocation3] sm:$0xff]
    %v78 = vld [vmem:[#allocation3 + $0x8] sm:$0xff]
    %v79 = vld [vmem:[#allocation3 + $0x10] sm:$0xff]
    %v80 = vld [vmem:[#allocation3 + $0x18] sm:$0xff]
    %v81 = vld [vmem:[#allocation3 + $0x20] sm:$0xff]
    %v82 = vld [vmem:[#allocation3 + $0x28] sm:$0xff]
    %v83 = vld [vmem:[#allocation3 + $0x30] sm:$0xff]
    %v84 = vld [vmem:[#allocation3 + $0x38] sm:$0xff]
    %v85 = vld [vmem:[#allocation3 + $0x40] sm:$0xff]
    %v86 = vld [vmem:[#allocation3 + $0x48] sm:$0xff]
    %v87 = vld [vmem:[#allocation3 + $0x50] sm:$0xff]
    %v88 = vld [vmem:[#allocation3 + $0x58] sm:$0xff]
    %v89 = vld [vmem:[#allocation3 + $0x60] sm:$0xff]
    %v90 = vld [vmem:[#allocation3 + $0x68] sm:$0xff]
    %v91 = vld [vmem:[#allocation3 + $0x70] sm:$0xff]
    %v92 = vld [vmem:[#allocation3 + $0x78] sm:$0xff]
    %v93 = vld [vmem:[#allocation9] sm:$0x1]
    %94 = vmatprep.subr.mxu0 0.0
    %95 = vmatpush1.msra.mxu0 %v77
    %96 = vmatprep.subr.mxu0 0.0
    %97 = vmatpush1.msra.mxu0 %v78
    %98 = vmatprep.subr.mxu0 0.0
    %99 = vmatpush1.msra.mxu0 %v79
    %100 = vmatprep.subr.mxu0 0.0
    %101 = vmatpush1.msra.mxu0 %v80
    %102 = vmatprep.subr.mxu0 0.0
    %103 = vmatpush1.msra.mxu0 %v81
    %104 = vmatprep.subr.mxu0 0.0
    %105 = vmatpush1.msra.mxu0 %v82
    %106 = vmatprep.subr.mxu0 0.0
    %107 = vmatpush1.msra.mxu0 %v83
    %108 = vmatprep.subr.mxu0 0.0
    %109 = vmatpush1.msra.mxu0 %v84
    %110 = vmatprep.subr.mxu0 0.0
    %111 = vmatpush1.msra.mxu0 %v85
    %112 = vmatprep.subr.mxu0 0.0
    %113 = vmatpush1.msra.mxu0 %v86
    %114 = vmatprep.subr.mxu0 0.0
    %115 = vmatpush1.msra.mxu0 %v87
    %116 = vmatprep.subr.mxu0 0.0
    %117 = vmatpush1.msra.mxu0 %v88
    %118 = vmatprep.subr.mxu0 0.0
    %119 = vmatpush1.msra.mxu0 %v89
    %120 = vmatprep.subr.mxu0 0.0
    %121 = vmatpush1.msra.mxu0 %v90
    %122 = vmatprep.subr.mxu0 0.0
    %123 = vmatpush1.msra.mxu0 %v91
    %124 = vmatprep.subr.mxu0 0.0
    %125 = vmatpush1.msra.mxu0 %v92
    %126 = vmatprep.subr.mxu0 0.0
    %127 = vmatpush1.msra.mxu0 0.0
    %128 = vmatprep.subr.mxu0 0.0
    %129 = vmatpush1.msra.mxu0 0.0
    %130 = vmatprep.subr.mxu0 0.0
    %131 = vmatpush1.msra.mxu0 0.0
    %132 = vmatprep.subr.mxu0 0.0
    %133 = vmatpush1.msra.mxu0 0.0
    %134 = vmatprep.subr.mxu0 0.0
    %135 = vmatpush1.msra.mxu0 0.0
    %136 = vmatprep.subr.mxu0 0.0
    %137 = vmatpush1.msra.mxu0 0.0
    %138 = vmatprep.subr.mxu0 0.0
    %139 = vmatpush1.msra.mxu0 0.0
    %140 = vmatprep.subr.mxu0 0.0
    %141 = vmatpush1.msra.mxu0 0.0
    %142 = vmatprep.subr.mxu0 0.0
    %143 = vmatpush1.msra.mxu0 0.0
    %144 = vmatprep.subr.mxu0 0.0
    %145 = vmatpush1.msra.mxu0 0.0
    %146 = vmatprep.subr.mxu0 0.0
    %147 = vmatpush1.msra.mxu0 0.0
    %148 = vmatprep.subr.mxu0 0.0
    %149 = vmatpush1.msra.mxu0 0.0
    %150 = vmatprep.subr.mxu0 0.0
    %151 = vmatpush1.msra.mxu0 0.0
    %152 = vmatprep.subr.mxu0 0.0
    %153 = vmatpush1.msra.mxu0 0.0
    %154 = vmatprep.subr.mxu0 0.0
    %155 = vmatpush1.msra.mxu0 0.0
    %156 = vmatprep.subr.mxu0 0.0
    %157 = vmatpush1.msra.mxu0 0.0
    %158 = vmatprep.mubr.f32.mxu0 0.0
    %159 = vmatmul.mubr.f32.gmra.mrb[0].mxu0 %v74
    %v160 = vpop.f32.mrb[0].mxu0
    %v161 = vadd.f32 %v93, %v160
    %v162 = vpop.f32.mrb[0].mxu0
    %163 = vdwg.mxu0
    %s164 = scalar_lea.vmem [#allocation7], 8
    %v165 = vld [vmem:[%s164] sm:$0xff]
    %166 = vst [vmem:[#allocation3] sm:$0xff] %v165
    %v167 = vld [vmem:[#allocation3] sm:$0xff]
    %v168 = vld [vmem:[#allocation3 + $0x8] sm:$0xff]
    %v169 = vld [vmem:[#allocation3 + $0x10] sm:$0xff]
    %v170 = vld [vmem:[#allocation3 + $0x18] sm:$0xff]
    %v171 = vld [vmem:[#allocation3 + $0x20] sm:$0xff]
    %v172 = vld [vmem:[#allocation3 + $0x28] sm:$0xff]
    %v173 = vld [vmem:[#allocation3 + $0x30] sm:$0xff]
    %v174 = vld [vmem:[#allocation3 + $0x38] sm:$0xff]
    %v175 = vld [vmem:[#allocation3 + $0x40] sm:$0xff]
    %v176 = vld [vmem:[#allocation3 + $0x48] sm:$0xff]
    %v177 = vld [vmem:[#allocation3 + $0x50] sm:$0xff]
    %v178 = vld [vmem:[#allocation3 + $0x58] sm:$0xff]
    %v179 = vld [vmem:[#allocation3 + $0x60] sm:$0xff]
    %v180 = vld [vmem:[#allocation3 + $0x68] sm:$0xff]
    %v181 = vld [vmem:[#allocation3 + $0x70] sm:$0xff]
    %v182 = vld [vmem:[#allocation3 + $0x78] sm:$0xff]
    %v183 = vld [vmem:[#allocation9 + $0x1] sm:$0x1]
    %184 = vmatprep.subr.mxu0 0.0
    %185 = vmatpush1.msra.mxu0 %v167
    %186 = vmatprep.subr.mxu0 0.0
    %187 = vmatpush1.msra.mxu0 %v168
    %188 = vmatprep.subr.mxu0 0.0
    %189 = vmatpush1.msra.mxu0 %v169
    %190 = vmatprep.subr.mxu0 0.0
    %191 = vmatpush1.msra.mxu0 %v170
    %192 = vmatprep.subr.mxu0 0.0
    %193 = vmatpush1.msra.mxu0 %v171
    %194 = vmatprep.subr.mxu0 0.0
    %195 = vmatpush1.msra.mxu0 %v172
    %196 = vmatprep.subr.mxu0 0.0
    %197 = vmatpush1.msra.mxu0 %v173
    %198 = vmatprep.subr.mxu0 0.0
    %199 = vmatpush1.msra.mxu0 %v174
    %200 = vmatprep.subr.mxu0 0.0
    %201 = vmatpush1.msra.mxu0 %v175
    %202 = vmatprep.subr.mxu0 0.0
    %203 = vmatpush1.msra.mxu0 %v176
    %204 = vmatprep.subr.mxu0 0.0
    %205 = vmatpush1.msra.mxu0 %v177
    %206 = vmatprep.subr.mxu0 0.0
    %207 = vmatpush1.msra.mxu0 %v178
    %208 = vmatprep.subr.mxu0 0.0
    %209 = vmatpush1.msra.mxu0 %v179
    %210 = vmatprep.subr.mxu0 0.0
    %211 = vmatpush1.msra.mxu0 %v180
    %212 = vmatprep.subr.mxu0 0.0
    %213 = vmatpush1.msra.mxu0 %v181
    %214 = vmatprep.subr.mxu0 0.0
    %215 = vmatpush1.msra.mxu0 %v182
    %216 = vmatprep.subr.mxu0 0.0
    %217 = vmatpush1.msra.mxu0 0.0
    %218 = vmatprep.subr.mxu0 0.0
    %219 = vmatpush1.msra.mxu0 0.0
    %220 = vmatprep.subr.mxu0 0.0
    %221 = vmatpush1.msra.mxu0 0.0
    %222 = vmatprep.subr.mxu0 0.0
    %223 = vmatpush1.msra.mxu0 0.0
    %224 = vmatprep.subr.mxu0 0.0
    %225 = vmatpush1.msra.mxu0 0.0
    %226 = vmatprep.subr.mxu0 0.0
    %227 = vmatpush1.msra.mxu0 0.0
    %228 = vmatprep.subr.mxu0 0.0
    %229 = vmatpush1.msra.mxu0 0.0
    %230 = vmatprep.subr.mxu0 0.0
    %231 = vmatpush1.msra.mxu0 0.0
    %232 = vmatprep.subr.mxu0 0.0
    %233 = vmatpush1.msra.mxu0 0.0
    %234 = vmatprep.subr.mxu0 0.0
    %235 = vmatpush1.msra.mxu0 0.0
    %236 = vmatprep.subr.mxu0 0.0
    %237 = vmatpush1.msra.mxu0 0.0
    %238 = vmatprep.subr.mxu0 0.0
    %239 = vmatpush1.msra.mxu0 0.0
    %240 = vmatprep.subr.mxu0 0.0
    %241 = vmatpush1.msra.mxu0 0.0
    %242 = vmatprep.subr.mxu0 0.0
    %243 = vmatpush1.msra.mxu0 0.0
    %244 = vmatprep.subr.mxu0 0.0
    %245 = vmatpush1.msra.mxu0 0.0
    %246 = vmatprep.subr.mxu0 0.0
    %247 = vmatpush1.msra.mxu0 0.0
    %248 = vmatprep.mubr.f32.mxu0 0.0
    %249 = vmatmul.mubr.f32.gmra.mrb[0].mxu0 %v161
    %v250 = vpop.f32.mrb[0].mxu0
    %v251 = vadd.f32 %v183, %v250
    %v252 = vpop.f32.mrb[0].mxu0
    %253 = vdwg.mxu0
    %s254 = scalar_lea.vmem [#allocation7], 16
    %v255 = vld [vmem:[%s254] sm:$0xff]
    %256 = vst [vmem:[#allocation3] sm:$0xff] %v255
    %v257 = vld [vmem:[#allocation3] sm:$0xff]
    %v258 = vld [vmem:[#allocation3 + $0x8] sm:$0xff]
    %v259 = vld [vmem:[#allocation3 + $0x10] sm:$0xff]
    %v260 = vld [vmem:[#allocation3 + $0x18] sm:$0xff]
    %v261 = vld [vmem:[#allocation3 + $0x20] sm:$0xff]
    %v262 = vld [vmem:[#allocation3 + $0x28] sm:$0xff]
    %v263 = vld [vmem:[#allocation3 + $0x30] sm:$0xff]
    %v264 = vld [vmem:[#allocation3 + $0x38] sm:$0xff]
    %v265 = vld [vmem:[#allocation3 + $0x40] sm:$0xff]
    %v266 = vld [vmem:[#allocation3 + $0x48] sm:$0xff]
    %v267 = vld [vmem:[#allocation3 + $0x50] sm:$0xff]
    %v268 = vld [vmem:[#allocation3 + $0x58] sm:$0xff]
    %v269 = vld [vmem:[#allocation3 + $0x60] sm:$0xff]
    %v270 = vld [vmem:[#allocation3 + $0x68] sm:$0xff]
    %v271 = vld [vmem:[#allocation3 + $0x70] sm:$0xff]
    %v272 = vld [vmem:[#allocation3 + $0x78] sm:$0xff]
    %v273 = vld [vmem:[#allocation9 + $0x2] sm:$0x1]
    %274 = vmatprep.subr.mxu0 0.0
    %275 = vmatpush1.msra.mxu0 %v257
    %276 = vmatprep.subr.mxu0 0.0
    %277 = vmatpush1.msra.mxu0 %v258
    %278 = vmatprep.subr.mxu0 0.0
    %279 = vmatpush1.msra.mxu0 %v259
    %280 = vmatprep.subr.mxu0 0.0
    %281 = vmatpush1.msra.mxu0 %v260
    %282 = vmatprep.subr.mxu0 0.0
    %283 = vmatpush1.msra.mxu0 %v261
    %284 = vmatprep.subr.mxu0 0.0
    %285 = vmatpush1.msra.mxu0 %v262
    %286 = vmatprep.subr.mxu0 0.0
    %287 = vmatpush1.msra.mxu0 %v263
    %288 = vmatprep.subr.mxu0 0.0
    %289 = vmatpush1.msra.mxu0 %v264
    %290 = vmatprep.subr.mxu0 0.0
    %291 = vmatpush1.msra.mxu0 %v265
    %292 = vmatprep.subr.mxu0 0.0
    %293 = vmatpush1.msra.mxu0 %v266
    %294 = vmatprep.subr.mxu0 0.0
    %295 = vmatpush1.msra.mxu0 %v267
    %296 = vmatprep.subr.mxu0 0.0
    %297 = vmatpush1.msra.mxu0 %v268
    %298 = vmatprep.subr.mxu0 0.0
    %299 = vmatpush1.msra.mxu0 %v269
    %300 = vmatprep.subr.mxu0 0.0
    %301 = vmatpush1.msra.mxu0 %v270
    %302 = vmatprep.subr.mxu0 0.0
    %303 = vmatpush1.msra.mxu0 %v271
    %304 = vmatprep.subr.mxu0 0.0
    %305 = vmatpush1.msra.mxu0 %v272
    %306 = vmatprep.subr.mxu0 0.0
    %307 = vmatpush1.msra.mxu0 0.0
    %308 = vmatprep.subr.mxu0 0.0
    %309 = vmatpush1.msra.mxu0 0.0
    %310 = vmatprep.subr.mxu0 0.0
    %311 = vmatpush1.msra.mxu0 0.0
    %312 = vmatprep.subr.mxu0 0.0
    %313 = vmatpush1.msra.mxu0 0.0
    %314 = vmatprep.subr.mxu0 0.0
    %315 = vmatpush1.msra.mxu0 0.0
    %316 = vmatprep.subr.mxu0 0.0
    %317 = vmatpush1.msra.mxu0 0.0
    %318 = vmatprep.subr.mxu0 0.0
    %319 = vmatpush1.msra.mxu0 0.0
    %320 = vmatprep.subr.mxu0 0.0
    %321 = vmatpush1.msra.mxu0 0.0
    %322 = vmatprep.subr.mxu0 0.0
    %323 = vmatpush1.msra.mxu0 0.0
    %324 = vmatprep.subr.mxu0 0.0
    %325 = vmatpush1.msra.mxu0 0.0
    %326 = vmatprep.subr.mxu0 0.0
    %327 = vmatpush1.msra.mxu0 0.0
    %328 = vmatprep.subr.mxu0 0.0
    %329 = vmatpush1.msra.mxu0 0.0
    %330 = vmatprep.subr.mxu0 0.0
    %331 = vmatpush1.msra.mxu0 0.0
    %332 = vmatprep.subr.mxu0 0.0
    %333 = vmatpush1.msra.mxu0 0.0
    %334 = vmatprep.subr.mxu0 0.0
    %335 = vmatpush1.msra.mxu0 0.0
    %336 = vmatprep.subr.mxu0 0.0
    %337 = vmatpush1.msra.mxu0 0.0
    %338 = vmatprep.mubr.f32.mxu0 0.0
    %339 = vmatmul.mubr.f32.gmra.mrb[0].mxu0 %v251
    %v340 = vpop.f32.mrb[0].mxu0
    %v341 = vadd.f32 %v273, %v340
    %v342 = vpop.f32.mrb[0].mxu0
    %343 = vdwg.mxu0
    %s344 = scalar_lea.vmem [#allocation7], 24
    %v345 = vld [vmem:[%s344] sm:$0xff]
    %346 = vst [vmem:[#allocation3] sm:$0xff] %v345
    %v347 = vld [vmem:[#allocation3] sm:$0xff]
    %v348 = vld [vmem:[#allocation3 + $0x8] sm:$0xff]
    %v349 = vld [vmem:[#allocation3 + $0x10] sm:$0xff]
    %v350 = vld [vmem:[#allocation3 + $0x18] sm:$0xff]
    %v351 = vld [vmem:[#allocation3 + $0x20] sm:$0xff]
    %v352 = vld [vmem:[#allocation3 + $0x28] sm:$0xff]
    %v353 = vld [vmem:[#allocation3 + $0x30] sm:$0xff]
    %v354 = vld [vmem:[#allocation3 + $0x38] sm:$0xff]
    %v355 = vld [vmem:[#allocation3 + $0x40] sm:$0xff]
    %v356 = vld [vmem:[#allocation3 + $0x48] sm:$0xff]
    %v357 = vld [vmem:[#allocation3 + $0x50] sm:$0xff]
    %v358 = vld [vmem:[#allocation3 + $0x58] sm:$0xff]
    %v359 = vld [vmem:[#allocation3 + $0x60] sm:$0xff]
    %v360 = vld [vmem:[#allocation3 + $0x68] sm:$0xff]
    %v361 = vld [vmem:[#allocation3 + $0x70] sm:$0xff]
    %v362 = vld [vmem:[#allocation3 + $0x78] sm:$0xff]
    %v363 = vld [vmem:[#allocation9 + $0x3] sm:$0x1]
    %364 = vmatprep.subr.mxu0 0.0
    %365 = vmatpush1.msra.mxu0 %v347
    %366 = vmatprep.subr.mxu0 0.0
    %367 = vmatpush1.msra.mxu0 %v348
    %368 = vmatprep.subr.mxu0 0.0
    %369 = vmatpush1.msra.mxu0 %v349
    %370 = vmatprep.subr.mxu0 0.0
    %371 = vmatpush1.msra.mxu0 %v350
    %372 = vmatprep.subr.mxu0 0.0
    %373 = vmatpush1.msra.mxu0 %v351
    %374 = vmatprep.subr.mxu0 0.0
    %375 = vmatpush1.msra.mxu0 %v352
    %376 = vmatprep.subr.mxu0 0.0
    %377 = vmatpush1.msra.mxu0 %v353
    %378 = vmatprep.subr.mxu0 0.0
    %379 = vmatpush1.msra.mxu0 %v354
    %380 = vmatprep.subr.mxu0 0.0
    %381 = vmatpush1.msra.mxu0 %v355
    %382 = vmatprep.subr.mxu0 0.0
    %383 = vmatpush1.msra.mxu0 %v356
    %384 = vmatprep.subr.mxu0 0.0
    %385 = vmatpush1.msra.mxu0 %v357
    %386 = vmatprep.subr.mxu0 0.0
    %387 = vmatpush1.msra.mxu0 %v358
    %388 = vmatprep.subr.mxu0 0.0
    %389 = vmatpush1.msra.mxu0 %v359
    %390 = vmatprep.subr.mxu0 0.0
    %391 = vmatpush1.msra.mxu0 %v360
    %392 = vmatprep.subr.mxu0 0.0
    %393 = vmatpush1.msra.mxu0 %v361
    %394 = vmatprep.subr.mxu0 0.0
    %395 = vmatpush1.msra.mxu0 %v362
    %396 = vmatprep.subr.mxu0 0.0
    %397 = vmatpush1.msra.mxu0 0.0
    %398 = vmatprep.subr.mxu0 0.0
    %399 = vmatpush1.msra.mxu0 0.0
    %400 = vmatprep.subr.mxu0 0.0
    %401 = vmatpush1.msra.mxu0 0.0
    %402 = vmatprep.subr.mxu0 0.0
    %403 = vmatpush1.msra.mxu0 0.0
    %404 = vmatprep.subr.mxu0 0.0
    %405 = vmatpush1.msra.mxu0 0.0
    %406 = vmatprep.subr.mxu0 0.0
    %407 = vmatpush1.msra.mxu0 0.0
    %408 = vmatprep.subr.mxu0 0.0
    %409 = vmatpush1.msra.mxu0 0.0
    %410 = vmatprep.subr.mxu0 0.0
    %411 = vmatpush1.msra.mxu0 0.0
    %412 = vmatprep.subr.mxu0 0.0
    %413 = vmatpush1.msra.mxu0 0.0
    %414 = vmatprep.subr.mxu0 0.0
    %415 = vmatpush1.msra.mxu0 0.0
    %416 = vmatprep.subr.mxu0 0.0
    %417 = vmatpush1.msra.mxu0 0.0
    %418 = vmatprep.subr.mxu0 0.0
    %419 = vmatpush1.msra.mxu0 0.0
    %420 = vmatprep.subr.mxu0 0.0
    %421 = vmatpush1.msra.mxu0 0.0
    %422 = vmatprep.subr.mxu0 0.0
    %423 = vmatpush1.msra.mxu0 0.0
    %424 = vmatprep.subr.mxu0 0.0
    %425 = vmatpush1.msra.mxu0 0.0
    %426 = vmatprep.subr.mxu0 0.0
    %427 = vmatpush1.msra.mxu0 0.0
    %428 = vmatprep.mubr.f32.mxu0 0.0
    %429 = vmatmul.mubr.f32.gmra.mrb[0].mxu0 %v341
    %v430 = vpop.f32.mrb[0].mxu0
    %v431 = vadd.f32 %v363, %v430
    %v432 = vpop.f32.mrb[0].mxu0
    %433 = vdwg.mxu0
    %s434 = scalar_lea.vmem [#allocation7], 32
    %v435 = vld [vmem:[%s434] sm:$0xff]
    %436 = vst [vmem:[#allocation3] sm:$0xff] %v435
    %v437 = vld [vmem:[#allocation3] sm:$0xff]
    %v438 = vld [vmem:[#allocation3 + $0x8] sm:$0xff]
    %v439 = vld [vmem:[#allocation3 + $0x10] sm:$0xff]
    %v440 = vld [vmem:[#allocation3 + $0x18] sm:$0xff]
    %v441 = vld [vmem:[#allocation3 + $0x20] sm:$0xff]
    %v442 = vld [vmem:[#allocation3 + $0x28] sm:$0xff]
    %v443 = vld [vmem:[#allocation3 + $0x30] sm:$0xff]
    %v444 = vld [vmem:[#allocation3 + $0x38] sm:$0xff]
    %v445 = vld [vmem:[#allocation3 + $0x40] sm:$0xff]
    %v446 = vld [vmem:[#allocation3 + $0x48] sm:$0xff]
    %v447 = vld [vmem:[#allocation3 + $0x50] sm:$0xff]
    %v448 = vld [vmem:[#allocation3 + $0x58] sm:$0xff]
    %v449 = vld [vmem:[#allocation3 + $0x60] sm:$0xff]
    %v450 = vld [vmem:[#allocation3 + $0x68] sm:$0xff]
    %v451 = vld [vmem:[#allocation3 + $0x70] sm:$0xff]
    %v452 = vld [vmem:[#allocation3 + $0x78] sm:$0xff]
    %v453 = vld [vmem:[#allocation9 + $0x4] sm:$0x1]
    %454 = vmatprep.subr.mxu0 0.0
    %455 = vmatpush1.msra.mxu0 %v437
    %456 = vmatprep.subr.mxu0 0.0
    %457 = vmatpush1.msra.mxu0 %v438
    %458 = vmatprep.subr.mxu0 0.0
    %459 = vmatpush1.msra.mxu0 %v439
    %460 = vmatprep.subr.mxu0 0.0
    %461 = vmatpush1.msra.mxu0 %v440
    %462 = vmatprep.subr.mxu0 0.0
    %463 = vmatpush1.msra.mxu0 %v441
    %464 = vmatprep.subr.mxu0 0.0
    %465 = vmatpush1.msra.mxu0 %v442
    %466 = vmatprep.subr.mxu0 0.0
    %467 = vmatpush1.msra.mxu0 %v443
    %468 = vmatprep.subr.mxu0 0.0
    %469 = vmatpush1.msra.mxu0 %v444
    %470 = vmatprep.subr.mxu0 0.0
    %471 = vmatpush1.msra.mxu0 %v445
    %472 = vmatprep.subr.mxu0 0.0
    %473 = vmatpush1.msra.mxu0 %v446
    %474 = vmatprep.subr.mxu0 0.0
    %475 = vmatpush1.msra.mxu0 %v447
    %476 = vmatprep.subr.mxu0 0.0
    %477 = vmatpush1.msra.mxu0 %v448
    %478 = vmatprep.subr.mxu0 0.0
    %479 = vmatpush1.msra.mxu0 %v449
    %480 = vmatprep.subr.mxu0 0.0
    %481 = vmatpush1.msra.mxu0 %v450
    %482 = vmatprep.subr.mxu0 0.0
    %483 = vmatpush1.msra.mxu0 %v451
    %484 = vmatprep.subr.mxu0 0.0
    %485 = vmatpush1.msra.mxu0 %v452
    %486 = vmatprep.subr.mxu0 0.0
    %487 = vmatpush1.msra.mxu0 0.0
    %488 = vmatprep.subr.mxu0 0.0
    %489 = vmatpush1.msra.mxu0 0.0
    %490 = vmatprep.subr.mxu0 0.0
    %491 = vmatpush1.msra.mxu0 0.0
    %492 = vmatprep.subr.mxu0 0.0
    %493 = vmatpush1.msra.mxu0 0.0
    %494 = vmatprep.subr.mxu0 0.0
    %495 = vmatpush1.msra.mxu0 0.0
    %496 = vmatprep.subr.mxu0 0.0
    %497 = vmatpush1.msra.mxu0 0.0
    %498 = vmatprep.subr.mxu0 0.0
    %499 = vmatpush1.msra.mxu0 0.0
    %500 = vmatprep.subr.mxu0 0.0
    %501 = vmatpush1.msra.mxu0 0.0
    %502 = vmatprep.subr.mxu0 0.0
    %503 = vmatpush1.msra.mxu0 0.0
    %504 = vmatprep.subr.mxu0 0.0
    %505 = vmatpush1.msra.mxu0 0.0
    %506 = vmatprep.subr.mxu0 0.0
    %507 = vmatpush1.msra.mxu0 0.0
    %508 = vmatprep.subr.mxu0 0.0
    %509 = vmatpush1.msra.mxu0 0.0
    %510 = vmatprep.subr.mxu0 0.0
    %511 = vmatpush1.msra.mxu0 0.0
    %512 = vmatprep.subr.mxu0 0.0
    %513 = vmatpush1.msra.mxu0 0.0
    %514 = vmatprep.subr.mxu0 0.0
    %515 = vmatpush1.msra.mxu0 0.0
    %516 = vmatprep.subr.mxu0 0.0
    %517 = vmatpush1.msra.mxu0 0.0
    %518 = vmatprep.mubr.f32.mxu0 0.0
    %519 = vmatmul.mubr.f32.gmra.mrb[0].mxu0 %v431
    %v520 = vpop.f32.mrb[0].mxu0
    %v521 = vadd.f32 %v453, %v520
    %v522 = vpop.f32.mrb[0].mxu0
    %523 = vdwg.mxu0
    %s524 = scalar_lea.vmem [#allocation7], 40
    %v525 = vld [vmem:[%s524] sm:$0xff]
    %526 = vst [vmem:[#allocation3] sm:$0xff] %v525
    %v527 = vld [vmem:[#allocation3] sm:$0xff]
    %v528 = vld [vmem:[#allocation3 + $0x8] sm:$0xff]
    %v529 = vld [vmem:[#allocation3 + $0x10] sm:$0xff]
    %v530 = vld [vmem:[#allocation3 + $0x18] sm:$0xff]
    %v531 = vld [vmem:[#allocation3 + $0x20] sm:$0xff]
    %v532 = vld [vmem:[#allocation3 + $0x28] sm:$0xff]
    %v533 = vld [vmem:[#allocation3 + $0x30] sm:$0xff]
    %v534 = vld [vmem:[#allocation3 + $0x38] sm:$0xff]
    %v535 = vld [vmem:[#allocation3 + $0x40] sm:$0xff]
    %v536 = vld [vmem:[#allocation3 + $0x48] sm:$0xff]
    %v537 = vld [vmem:[#allocation3 + $0x50] sm:$0xff]
    %v538 = vld [vmem:[#allocation3 + $0x58] sm:$0xff]
    %v539 = vld [vmem:[#allocation3 + $0x60] sm:$0xff]
    %v540 = vld [vmem:[#allocation3 + $0x68] sm:$0xff]
    %v541 = vld [vmem:[#allocation3 + $0x70] sm:$0xff]
    %v542 = vld [vmem:[#allocation3 + $0x78] sm:$0xff]
    %v543 = vld [vmem:[#allocation9 + $0x5] sm:$0x1]
    %544 = vmatprep.subr.mxu0 0.0
    %545 = vmatpush1.msra.mxu0 %v527
    %546 = vmatprep.subr.mxu0 0.0
    %547 = vmatpush1.msra.mxu0 %v528
    %548 = vmatprep.subr.mxu0 0.0
    %549 = vmatpush1.msra.mxu0 %v529
    %550 = vmatprep.subr.mxu0 0.0
    %551 = vmatpush1.msra.mxu0 %v530
    %552 = vmatprep.subr.mxu0 0.0
    %553 = vmatpush1.msra.mxu0 %v531
    %554 = vmatprep.subr.mxu0 0.0
    %555 = vmatpush1.msra.mxu0 %v532
    %556 = vmatprep.subr.mxu0 0.0
    %557 = vmatpush1.msra.mxu0 %v533
    %558 = vmatprep.subr.mxu0 0.0
    %559 = vmatpush1.msra.mxu0 %v534
    %560 = vmatprep.subr.mxu0 0.0
    %561 = vmatpush1.msra.mxu0 %v535
    %562 = vmatprep.subr.mxu0 0.0
    %563 = vmatpush1.msra.mxu0 %v536
    %564 = vmatprep.subr.mxu0 0.0
    %565 = vmatpush1.msra.mxu0 %v537
    %566 = vmatprep.subr.mxu0 0.0
    %567 = vmatpush1.msra.mxu0 %v538
    %568 = vmatprep.subr.mxu0 0.0
    %569 = vmatpush1.msra.mxu0 %v539
    %570 = vmatprep.subr.mxu0 0.0
    %571 = vmatpush1.msra.mxu0 %v540
    %572 = vmatprep.subr.mxu0 0.0
    %573 = vmatpush1.msra.mxu0 %v541
    %574 = vmatprep.subr.mxu0 0.0
    %575 = vmatpush1.msra.mxu0 %v542
    %576 = vmatprep.subr.mxu0 0.0
    %577 = vmatpush1.msra.mxu0 0.0
    %578 = vmatprep.subr.mxu0 0.0
    %579 = vmatpush1.msra.mxu0 0.0
    %580 = vmatprep.subr.mxu0 0.0
    %581 = vmatpush1.msra.mxu0 0.0
    %582 = vmatprep.subr.mxu0 0.0
    %583 = vmatpush1.msra.mxu0 0.0
    %584 = vmatprep.subr.mxu0 0.0
    %585 = vmatpush1.msra.mxu0 0.0
    %586 = vmatprep.subr.mxu0 0.0
    %587 = vmatpush1.msra.mxu0 0.0
    %588 = vmatprep.subr.mxu0 0.0
    %589 = vmatpush1.msra.mxu0 0.0
    %590 = vmatprep.subr.mxu0 0.0
    %591 = vmatpush1.msra.mxu0 0.0
    %592 = vmatprep.subr.mxu0 0.0
    %593 = vmatpush1.msra.mxu0 0.0
    %594 = vmatprep.subr.mxu0 0.0
    %595 = vmatpush1.msra.mxu0 0.0
    %596 = vmatprep.subr.mxu0 0.0
    %597 = vmatpush1.msra.mxu0 0.0
    %598 = vmatprep.subr.mxu0 0.0
    %599 = vmatpush1.msra.mxu0 0.0
    %600 = vmatprep.subr.mxu0 0.0
    %601 = vmatpush1.msra.mxu0 0.0
    %602 = vmatprep.subr.mxu0 0.0
    %603 = vmatpush1.msra.mxu0 0.0
    %604 = vmatprep.subr.mxu0 0.0
    %605 = vmatpush1.msra.mxu0 0.0
    %606 = vmatprep.subr.mxu0 0.0
    %607 = vmatpush1.msra.mxu0 0.0
    %608 = vmatprep.mubr.f32.mxu0 0.0
    %609 = vmatmul.mubr.f32.gmra.mrb[0].mxu0 %v521
    %v610 = vpop.f32.mrb[0].mxu0
    %v611 = vadd.f32 %v543, %v610
    %v612 = vpop.f32.mrb[0].mxu0
    %613 = vdwg.mxu0
    %s614 = scalar_lea.vmem [#allocation7], 48
    %v615 = vld [vmem:[%s614] sm:$0xff]
    %616 = vst [vmem:[#allocation3] sm:$0xff] %v615
    %v617 = vld [vmem:[#allocation3] sm:$0xff]
    %v618 = vld [vmem:[#allocation3 + $0x8] sm:$0xff]
    %v619 = vld [vmem:[#allocation3 + $0x10] sm:$0xff]
    %v620 = vld [vmem:[#allocation3 + $0x18] sm:$0xff]
    %v621 = vld [vmem:[#allocation3 + $0x20] sm:$0xff]
    %v622 = vld [vmem:[#allocation3 + $0x28] sm:$0xff]
    %v623 = vld [vmem:[#allocation3 + $0x30] sm:$0xff]
    %v624 = vld [vmem:[#allocation3 + $0x38] sm:$0xff]
    %v625 = vld [vmem:[#allocation3 + $0x40] sm:$0xff]
    %v626 = vld [vmem:[#allocation3 + $0x48] sm:$0xff]
    %v627 = vld [vmem:[#allocation3 + $0x50] sm:$0xff]
    %v628 = vld [vmem:[#allocation3 + $0x58] sm:$0xff]
    %v629 = vld [vmem:[#allocation3 + $0x60] sm:$0xff]
    %v630 = vld [vmem:[#allocation3 + $0x68] sm:$0xff]
    %v631 = vld [vmem:[#allocation3 + $0x70] sm:$0xff]
    %v632 = vld [vmem:[#allocation3 + $0x78] sm:$0xff]
    %v633 = vld [vmem:[#allocation9 + $0x6] sm:$0x1]
    %634 = vmatprep.subr.mxu0 0.0
    %635 = vmatpush1.msra.mxu0 %v617
    %636 = vmatprep.subr.mxu0 0.0
    %637 = vmatpush1.msra.mxu0 %v618
    %638 = vmatprep.subr.mxu0 0.0
    %639 = vmatpush1.msra.mxu0 %v619
    %640 = vmatprep.subr.mxu0 0.0
    %641 = vmatpush1.msra.mxu0 %v620
    %642 = vmatprep.subr.mxu0 0.0
    %643 = vmatpush1.msra.mxu0 %v621
    %644 = vmatprep.subr.mxu0 0.0
    %645 = vmatpush1.msra.mxu0 %v622
    %646 = vmatprep.subr.mxu0 0.0
    %647 = vmatpush1.msra.mxu0 %v623
    %648 = vmatprep.subr.mxu0 0.0
    %649 = vmatpush1.msra.mxu0 %v624
    %650 = vmatprep.subr.mxu0 0.0
    %651 = vmatpush1.msra.mxu0 %v625
    %652 = vmatprep.subr.mxu0 0.0
    %653 = vmatpush1.msra.mxu0 %v626
    %654 = vmatprep.subr.mxu0 0.0
    %655 = vmatpush1.msra.mxu0 %v627
    %656 = vmatprep.subr.mxu0 0.0
    %657 = vmatpush1.msra.mxu0 %v628
    %658 = vmatprep.subr.mxu0 0.0
    %659 = vmatpush1.msra.mxu0 %v629
    %660 = vmatprep.subr.mxu0 0.0
    %661 = vmatpush1.msra.mxu0 %v630
    %662 = vmatprep.subr.mxu0 0.0
    %663 = vmatpush1.msra.mxu0 %v631
    %664 = vmatprep.subr.mxu0 0.0
    %665 = vmatpush1.msra.mxu0 %v632
    %666 = vmatprep.subr.mxu0 0.0
    %667 = vmatpush1.msra.mxu0 0.0
    %668 = vmatprep.subr.mxu0 0.0
    %669 = vmatpush1.msra.mxu0 0.0
    %670 = vmatprep.subr.mxu0 0.0
    %671 = vmatpush1.msra.mxu0 0.0
    %672 = vmatprep.subr.mxu0 0.0
    %673 = vmatpush1.msra.mxu0 0.0
    %674 = vmatprep.subr.mxu0 0.0
    %675 = vmatpush1.msra.mxu0 0.0
    %676 = vmatprep.subr.mxu0 0.0
    %677 = vmatpush1.msra.mxu0 0.0
    %678 = vmatprep.subr.mxu0 0.0
    %679 = vmatpush1.msra.mxu0 0.0
    %680 = vmatprep.subr.mxu0 0.0
    %681 = vmatpush1.msra.mxu0 0.0
    %682 = vmatprep.subr.mxu0 0.0
    %683 = vmatpush1.msra.mxu0 0.0
    %684 = vmatprep.subr.mxu0 0.0
    %685 = vmatpush1.msra.mxu0 0.0
    %686 = vmatprep.subr.mxu0 0.0
    %687 = vmatpush1.msra.mxu0 0.0
    %688 = vmatprep.subr.mxu0 0.0
    %689 = vmatpush1.msra.mxu0 0.0
    %690 = vmatprep.subr.mxu0 0.0
    %691 = vmatpush1.msra.mxu0 0.0
    %692 = vmatprep.subr.mxu0 0.0
    %693 = vmatpush1.msra.mxu0 0.0
    %694 = vmatprep.subr.mxu0 0.0
    %695 = vmatpush1.msra.mxu0 0.0
    %696 = vmatprep.subr.mxu0 0.0
    %697 = vmatpush1.msra.mxu0 0.0
    %698 = vmatprep.mubr.f32.mxu0 0.0
    %699 = vmatmul.mubr.f32.gmra.mrb[0].mxu0 %v611
    %v700 = vpop.f32.mrb[0].mxu0
    %v701 = vadd.f32 %v633, %v700
    %v702 = vpop.f32.mrb[0].mxu0
    %703 = vdwg.mxu0
    %s704 = scalar_lea.vmem [#allocation7], 56
    %v705 = vld [vmem:[%s704] sm:$0xff]
    %706 = vst [vmem:[#allocation3] sm:$0xff] %v705
    %v707 = vld [vmem:[#allocation3] sm:$0xff]
    %v708 = vld [vmem:[#allocation3 + $0x8] sm:$0xff]
    %v709 = vld [vmem:[#allocation3 + $0x10] sm:$0xff]
    %v710 = vld [vmem:[#allocation3 + $0x18] sm:$0xff]
    %v711 = vld [vmem:[#allocation3 + $0x20] sm:$0xff]
    %v712 = vld [vmem:[#allocation3 + $0x28] sm:$0xff]
    %v713 = vld [vmem:[#allocation3 + $0x30] sm:$0xff]
    %v714 = vld [vmem:[#allocation3 + $0x38] sm:$0xff]
    %v715 = vld [vmem:[#allocation3 + $0x40] sm:$0xff]
    %v716 = vld [vmem:[#allocation3 + $0x48] sm:$0xff]
    %v717 = vld [vmem:[#allocation3 + $0x50] sm:$0xff]
    %v718 = vld [vmem:[#allocation3 + $0x58] sm:$0xff]
    %v719 = vld [vmem:[#allocation3 + $0x60] sm:$0xff]
    %v720 = vld [vmem:[#allocation3 + $0x68] sm:$0xff]
    %v721 = vld [vmem:[#allocation3 + $0x70] sm:$0xff]
    %v722 = vld [vmem:[#allocation3 + $0x78] sm:$0xff]
    %v723 = vld [vmem:[#allocation9 + $0x7] sm:$0x1]
    %724 = vmatprep.subr.mxu0 0.0
    %725 = vmatpush1.msra.mxu0 %v707
    %726 = vmatprep.subr.mxu0 0.0
    %727 = vmatpush1.msra.mxu0 %v708
    %728 = vmatprep.subr.mxu0 0.0
    %729 = vmatpush1.msra.mxu0 %v709
    %730 = vmatprep.subr.mxu0 0.0
    %731 = vmatpush1.msra.mxu0 %v710
    %732 = vmatprep.subr.mxu0 0.0
    %733 = vmatpush1.msra.mxu0 %v711
    %734 = vmatprep.subr.mxu0 0.0
    %735 = vmatpush1.msra.mxu0 %v712
    %736 = vmatprep.subr.mxu0 0.0
    %737 = vmatpush1.msra.mxu0 %v713
    %738 = vmatprep.subr.mxu0 0.0
    %739 = vmatpush1.msra.mxu0 %v714
    %740 = vmatprep.subr.mxu0 0.0
    %741 = vmatpush1.msra.mxu0 %v715
    %742 = vmatprep.subr.mxu0 0.0
    %743 = vmatpush1.msra.mxu0 %v716
    %744 = vmatprep.subr.mxu0 0.0
    %745 = vmatpush1.msra.mxu0 %v717
    %746 = vmatprep.subr.mxu0 0.0
    %747 = vmatpush1.msra.mxu0 %v718
    %748 = vmatprep.subr.mxu0 0.0
    %749 = vmatpush1.msra.mxu0 %v719
    %750 = vmatprep.subr.mxu0 0.0
    %751 = vmatpush1.msra.mxu0 %v720
    %752 = vmatprep.subr.mxu0 0.0
    %753 = vmatpush1.msra.mxu0 %v721
    %754 = vmatprep.subr.mxu0 0.0
    %755 = vmatpush1.msra.mxu0 %v722
    %756 = vmatprep.subr.mxu0 0.0
    %757 = vmatpush1.msra.mxu0 0.0
    %758 = vmatprep.subr.mxu0 0.0
    %759 = vmatpush1.msra.mxu0 0.0
    %760 = vmatprep.subr.mxu0 0.0
    %761 = vmatpush1.msra.mxu0 0.0
    %762 = vmatprep.subr.mxu0 0.0
    %763 = vmatpush1.msra.mxu0 0.0
    %764 = vmatprep.subr.mxu0 0.0
    %765 = vmatpush1.msra.mxu0 0.0
    %766 = vmatprep.subr.mxu0 0.0
    %767 = vmatpush1.msra.mxu0 0.0
    %768 = vmatprep.subr.mxu0 0.0
    %769 = vmatpush1.msra.mxu0 0.0
    %770 = vmatprep.subr.mxu0 0.0
    %771 = vmatpush1.msra.mxu0 0.0
    %772 = vmatprep.subr.mxu0 0.0
    %773 = vmatpush1.msra.mxu0 0.0
    %774 = vmatprep.subr.mxu0 0.0
    %775 = vmatpush1.msra.mxu0 0.0
    %776 = vmatprep.subr.mxu0 0.0
    %777 = vmatpush1.msra.mxu0 0.0
    %778 = vmatprep.subr.mxu0 0.0
    %779 = vmatpush1.msra.mxu0 0.0
    %780 = vmatprep.subr.mxu0 0.0
    %781 = vmatpush1.msra.mxu0 0.0
    %782 = vmatprep.subr.mxu0 0.0
    %783 = vmatpush1.msra.mxu0 0.0
    %784 = vmatprep.subr.mxu0 0.0
    %785 = vmatpush1.msra.mxu0 0.0
    %786 = vmatprep.subr.mxu0 0.0
    %787 = vmatpush1.msra.mxu0 0.0
    %788 = vmatprep.mubr.f32.mxu0 0.0
    %789 = vmatmul.mubr.f32.gmra.mrb[0].mxu0 %v701
    %v790 = vpop.f32.mrb[0].mxu0
    %v791 = vadd.f32 %v723, %v790
    %v792 = vpop.f32.mrb[0].mxu0
    %793 = vdwg.mxu0
    %v795 = vrot.slane %v251, 7
    %v798 = vrot.slane %v341, 6
    %v801 = vrot.slane %v431, 5
    %v804 = vrot.slane %v521, 4
    %v807 = vrot.slane %v611, 3
    %v810 = vrot.slane %v701, 2
    %v813 = vrot.slane %v791, 1
    %vm815 = vcmask 1040384
    %v816 = vsel %vm815, %v161, %v795
    %vm817 = vcmask 1041408
    %v818 = vsel %vm817, %v816, %v798
    %vm819 = vcmask 1042432
    %v820 = vsel %vm819, %v818, %v801
    %vm821 = vcmask 1043456
    %v822 = vsel %vm821, %v820, %v804
    %vm823 = vcmask 1044480
    %v824 = vsel %vm823, %v822, %v807
    %vm825 = vcmask 1045504
    %v826 = vsel %vm825, %v824, %v810
    %vm827 = vcmask 1046528
    %v828 = vsel %vm827, %v826, %v813
    %829 = vst [vmem:[#allocation10] sm:$0xff] %v828
    %830 = vst [vmem:[#allocation2] sm:$0x1] %v791
    // Predicated region
    $region30: #{tpu_custom_call.1} parent=1 // pred_check
      _
    $region31: #{tpu_custom_call.1} parent=1 // pred_check_branch
      %832 = sbr.rel (0) target = $region33
    $region32: #{tpu_custom_call.1} parent=1 // pred_region
      %s834 = ssub.s32 128, 128
      %835 = vsyncadd [#allocation6], %s834
      %s837 = sshll.u32 [#allocation10], 4
      %s838 = int_to_ptr.vmem [resolvable:$true] %s837
      %840 = dma.vmem_to_hbm [thread:$0]  %s838, 128, %s3, [#allocation6]
    $region33: #{tpu_custom_call.1} parent=1 // pred_fallthru
      _
    // Predicated region
    $region34: #{tpu_custom_call.1} parent=1 // pred_check
      _
    $region35: #{tpu_custom_call.1} parent=1 // pred_check_branch
      %842 = sbr.rel (0) target = $region37
    $region36: #{tpu_custom_call.1} parent=1 // pred_region
      %843 = dma.done [#allocation6], 128
    $region37: #{tpu_custom_call.1} parent=1 // pred_fallthru
      _
    %844 = vsyncpa [#allocation5], 1
    %845 = vsyncpa [#allocation8], 1
    %846 = vsyncpa [#allocation6], 1

</llo_original>
